<compile_context>
chip_gen: v5e
topology: v5e:2x2
jax: 0.10.0
libtpu: 0.0.40
codegen_flags: <defaults>
</compile_context>

<pallas_src>
import functools

import jax
import jax.numpy as jnp
import numpy as np
from jax.experimental import pallas as pl
from jax.experimental.pallas import tpu as pltpu


# ----------------------------------------------------------------------------
# Pallas kernel: the whole forward pass hot path.
# ----------------------------------------------------------------------------
def fnm_kernel(x_ref, w_ref, aff_ref, scal_ref, o_ref, *, in_dim, hidden):
    alpha = scal_ref[0]          # scalar parameters live in SMEM
    beta = scal_ref[1]
    sqrt_c = scal_ref[2]
    eps_bn = 1e-5

    # Static views into the packed operands (zero runtime cost).
    w1 = w_ref[0:in_dim, :]                          # (in_dim, hidden) bf16
    mt = w_ref[in_dim:in_dim + hidden, :]            # (hidden, hidden) bf16
    w2 = w_ref[in_dim + hidden:in_dim + 2 * hidden, :]  # (hidden, out_pad) bf16
    g1 = aff_ref[0:1, :]
    bb1 = aff_ref[1:2, :]
    g2 = aff_ref[2:3, :]
    bb2 = aff_ref[3:4, :]
    b2 = aff_ref[4:5, :]

    # ---- fc1 (bias dropped: training-mode BN1 mean-subtraction cancels it) ----
    x = x_ref[...]                                   # bf16, cast in wrapper
    h = jnp.dot(x, w1, preferred_element_type=jnp.float32)

    # ---- BatchNorm1d (training mode), one-pass var, fused scale/shift + ReLU ----
    mu1 = jnp.mean(h, axis=0, keepdims=True)
    var1 = jnp.maximum(jnp.mean(h * h, axis=0, keepdims=True) - mu1 * mu1, 0.0)
    scale1 = g1 * jax.lax.rsqrt(var1 + eps_bn)
    shift1 = bb1 - mu1 * scale1
    h = jnp.maximum(h * scale1 + shift1, 0.0)

    # ---- log_map_origin (Poincare ball, curvature c) ----
    nrm_h = jnp.sqrt(jnp.sum(h * h, axis=1, keepdims=True))
    scn = sqrt_c * nrm_h
    scn_cl = jnp.clip(scn, 0.0, 1.0 - 1e-5)
    atanh = 0.5 * (jnp.log1p(scn_cl) - jnp.log1p(-scn_cl))        # exact artanh
    ratio_l = atanh * pl.reciprocal(jnp.maximum(scn, 1e-15), approx=True)
    ratio_l = jnp.where(scn < 1e-4, 1.0, ratio_l)                 # small-norm limit
    u = h * ratio_l

    # ---- Fourier phase filter: Re(ifft(fft(u)*H_eff)) == u @ M^T (MXU) ----
    v = jnp.dot(u.astype(jnp.bfloat16), mt, preferred_element_type=jnp.float32)

    # ---- exp_map_origin ----
    nrm_v = jnp.sqrt(jnp.sum(v * v, axis=1, keepdims=True))
    scv = sqrt_c * nrm_v
    ratio_e = jnp.tanh(scv) * pl.reciprocal(jnp.maximum(scv, 1e-15), approx=True)
    ratio_e = jnp.where(scv < 1e-4, 1.0, ratio_e)                 # tanh(x)/x -> 1
    y = v * ratio_e

    # ---- residual mix + fused BatchNorm2 + ReLU ----
    h2 = alpha * y + beta * h
    mu2 = jnp.mean(h2, axis=0, keepdims=True)
    var2 = jnp.maximum(jnp.mean(h2 * h2, axis=0, keepdims=True) - mu2 * mu2, 0.0)
    scale2 = g2 * jax.lax.rsqrt(var2 + eps_bn)
    shift2 = bb2 - mu2 * scale2
    h3 = jnp.maximum(h2 * scale2 + shift2, 0.0)

    # ---- fc2 (zero-padded to 128 output lanes -> dense, unmasked store) ----
    o_ref[...] = (jnp.dot(h3.astype(jnp.bfloat16), w2,
                          preferred_element_type=jnp.float32) + b2
                  ).astype(o_ref.dtype)


# ----------------------------------------------------------------------------
# Wrapper: parameter plumbing + pallas_call.
# ----------------------------------------------------------------------------
@functools.partial(jax.jit, static_argnames=("out_dim",))
def fft_stacked_hb_fourier(x, params, out_dim=10):
    B = x.shape[0]
    xf = x.reshape(B, -1).astype(jnp.bfloat16)       # x.view(B, -1), bf16 feed
    w_pack, aff, scalars = params
    in_dim = xf.shape[1]
    hidden = w_pack.shape[1]                          # == out_pad (128 here)
    assert w_pack.shape[0] == in_dim + 2 * hidden

    kernel = functools.partial(fnm_kernel, in_dim=in_dim, hidden=hidden)
    vmem = pl.BlockSpec(memory_space=pltpu.MemorySpace.VMEM)
    smem = pl.BlockSpec(memory_space=pltpu.MemorySpace.SMEM)

    out_full = pl.pallas_call(
        kernel,
        out_shape=jax.ShapeDtypeStruct((B, hidden), jnp.float32),
        in_specs=[vmem, vmem, vmem, smem],
        out_specs=vmem,
    )(xf, w_pack, aff, scalars)
    # Padded columns are exactly zero; slice back to the logical out_dim.
    return out_full[:, :out_dim]


# ----------------------------------------------------------------------------
# Parameter construction (glue, not hot path).
# ----------------------------------------------------------------------------
def build_params(key, in_dim, hidden_dim, out_dim, L, c):
    # Packed-weight layout requires all three matrices to share the trailing
    # (lane) dim; here hidden_dim == out_pad == 128.
    assert hidden_dim % 128 == 0 and in_dim % 8 == 0
    out_pad = hidden_dim

    ks = jax.random.split(key, 9)
    lim1 = 1.0 / np.sqrt(in_dim)
    lim2 = 1.0 / np.sqrt(hidden_dim)
    # PyTorch Linear stores (out,in); we store transposed for x @ W.
    w1 = jax.random.uniform(ks[0], (in_dim, hidden_dim), jnp.float32, -lim1, lim1)
    b1 = jax.random.uniform(ks[1], (hidden_dim,), jnp.float32, -lim1, lim1)
    w2 = jax.random.uniform(ks[2], (hidden_dim, out_dim), jnp.float32, -lim2, lim2)
    b2 = jax.random.uniform(ks[3], (out_dim,), jnp.float32, -lim2, lim2)
    # BatchNorm affine params (perturbed from the 1/0 defaults to exercise them)
    g1 = 1.0 + 0.1 * jax.random.normal(ks[4], (hidden_dim,), jnp.float32)
    bb1 = 0.1 * jax.random.normal(ks[5], (hidden_dim,), jnp.float32)
    g2 = 1.0 + 0.1 * jax.random.normal(ks[6], (hidden_dim,), jnp.float32)
    bb2 = 0.1 * jax.random.normal(ks[7], (hidden_dim,), jnp.float32)
    # phi tiny so theta = L * phi is O(1) (module init is zeros).
    phi = 1e-8 * jax.random.normal(ks[8], (hidden_dim,), jnp.float32)
    alpha = jnp.float32(1.0)
    beta = jnp.float32(0.5)

    # Exact real circulant equivalent of Re(ifft(fft(.) * exp(i*L*phi))).
    theta = (L * phi).astype(jnp.float32)
    N = hidden_dim
    n = jnp.arange(N)
    F = jnp.exp(-2j * jnp.pi * jnp.outer(n, n) / N).astype(jnp.complex64)
    Finv = (jnp.exp(2j * jnp.pi * jnp.outer(n, n) / N) / N).astype(jnp.complex64)
    H = jnp.exp(1j * theta.astype(jnp.complex64))
    M = jnp.real(Finv @ (H[:, None] * F)).astype(jnp.float32)  # v = M @ u
    mt = M.T                                                   # so v = u @ M^T

    # Lane-dense output: zero-pad fc2 to out_pad columns.
    w2p = jnp.zeros((hidden_dim, out_pad), jnp.float32).at[:, :out_dim].set(w2)
    b2p = jnp.zeros((out_pad,), jnp.float32).at[:out_dim].set(b2)

    # One bf16 packed weight operand: [w1; M^T; w2p] stacked on the K axis.
    w_pack = jnp.concatenate([w1, mt, w2p], axis=0).astype(jnp.bfloat16)
    # One f32 packed affine operand; rows: g1, bb1, g2, bb2, b2p (rest zero).
    aff = jnp.zeros((8, hidden_dim), jnp.float32)
    aff = (aff.at[0].set(g1).at[1].set(bb1).at[2].set(g2)
              .at[3].set(bb2).at[4].set(b2p))
    scalars = jnp.array([alpha, beta, np.sqrt(c)], dtype=jnp.float32)

    kernel_params = (w_pack, aff, scalars)
    # Full-precision originals (incl. the BN-cancelled b1) for the reference.
    ref_params = dict(w1=w1, b1=b1, g1=g1, bb1=bb1, theta=theta, g2=g2,
                      bb2=bb2, w2=w2, b2=b2, alpha=alpha, beta=beta,
                      sqrt_c=jnp.float32(np.sqrt(c)))
    return kernel_params, ref_params


def reference_forward(x, rp, out_dim=10):
    """Pure-JAX reference using jnp.fft (sanity check only).

    Mirrors the kernel's bf16 MXU feeds (bf16-rounded operands, f32 accumulate)
    so the comparison checks the circulant-vs-FFT equivalence, the fused BN and
    the Poincare maps, not dtype noise.  Includes the fc1 bias b1 to confirm
    the training-mode-BN cancellation the kernel relies on.
    """
    eps = 1e-5
    B = x.shape[0]
    sqrt_c = rp["sqrt_c"]

    def bdot(a, w):
        return jnp.dot(a.astype(jnp.bfloat16).astype(jnp.float32),
                       w.astype(jnp.bfloat16).astype(jnp.float32),
                       preferred_element_type=jnp.float32)

    h = bdot(x.reshape(B, -1).astype(jnp.float32), rp["w1"]) + rp["b1"][None, :]
    mu = h.mean(0, keepdims=True)
    var = ((h - mu) ** 2).mean(0, keepdims=True)
    h = jnp.maximum((h - mu) / jnp.sqrt(var + eps) * rp["g1"][None, :]
                    + rp["bb1"][None, :], 0.0)
    nrm = jnp.linalg.norm(h, axis=1, keepdims=True)
    scn = sqrt_c * nrm
    u = h * (jnp.arctanh(jnp.clip(scn, 1e-15, 1 - 1e-5)) / jnp.maximum(scn, 1e-15))
    u_r = u.astype(jnp.bfloat16).astype(jnp.float32)        # mirror bf16 MXU feed
    U = jnp.fft.fft(u_r.astype(jnp.complex64), axis=1)
    Heff = jnp.exp(1j * rp["theta"].astype(jnp.complex64))
    v = jnp.real(jnp.fft.ifft(U * Heff[None, :], axis=1)).astype(jnp.float32)
    nv = jnp.linalg.norm(v, axis=1, keepdims=True)
    scv = sqrt_c * nv
    y = v * (jnp.tanh(scv) / jnp.maximum(scv, 1e-15))
    h2 = rp["alpha"] * y + rp["beta"] * h
    mu2 = h2.mean(0, keepdims=True)
    var2 = ((h2 - mu2) ** 2).mean(0, keepdims=True)
    h3 = jnp.maximum((h2 - mu2) / jnp.sqrt(var2 + eps) * rp["g2"][None, :]
                     + rp["bb2"][None, :], 0.0)
    return bdot(h3, rp["w2"]) + rp["b2"][None, :]


if __name__ == "__main__":
    B, C, Hs, Ws = 2, 4, 16, 16          # small NCHW input
    in_dim = C * Hs * Ws                 # 1024 (stands in for 784)
    hidden_dim = 128                     # stands in for 256
    out_dim = 10
    L, c = 100000000, 0.001

    key = jax.random.PRNGKey(0)
    kx, kp = jax.random.split(key)
    x = jax.random.normal(kx, (B, C, Hs, Ws), jnp.float32)

    kernel_params, ref_params = build_params(kp, in_dim, hidden_dim, out_dim, L, c)

    out = fft_stacked_hb_fourier(x, kernel_params, out_dim=out_dim)
    out = jax.block_until_ready(out)

    ref = jax.block_until_ready(reference_forward(x, ref_params, out_dim=out_dim))
    assert out.shape == (B, out_dim)
    assert np.allclose(np.asarray(out), np.asarray(ref), rtol=2e-2, atol=2e-2), (
        "mismatch vs pure-JAX reference")

    print("KERNEL_OK")
</pallas_src>

<mosaic_0001>
module attributes {stable_mosaic.version = 11 : i64} {
  func.func @fnm_kernel(%arg0: memref<2x1024xbf16, #tpu.memory_space<vmem>>, %arg1: memref<1280x128xbf16, #tpu.memory_space<vmem>>, %arg2: memref<8x128xf32, #tpu.memory_space<vmem>>, %arg3: memref<3xf32, #tpu.memory_space<smem>>, %arg4: memref<2x128xf32, #tpu.memory_space<vmem>>) attributes {dimension_semantics = [], scalar_prefetch = 0 : i64, scratch_operands = 0 : i64, tpu.core_type = #tpu.core_type<tc>} {
    %c0 = arith.constant 0 : index
    %0 = memref.load %arg3[%c0] : memref<3xf32, #tpu.memory_space<smem>>
    %c1 = arith.constant 1 : index
    %1 = memref.load %arg3[%c1] : memref<3xf32, #tpu.memory_space<smem>>
    %c2 = arith.constant 2 : index
    %2 = memref.load %arg3[%c2] : memref<3xf32, #tpu.memory_space<smem>>
    %c0_0 = arith.constant 0 : index
    %c0_1 = arith.constant 0 : index
    %3 = vector.load %arg1[%c0_0, %c0_1] : memref<1280x128xbf16, #tpu.memory_space<vmem>>, vector<1024x128xbf16>
    %c1024 = arith.constant 1024 : index
    %c0_2 = arith.constant 0 : index
    %4 = vector.load %arg1[%c1024, %c0_2] : memref<1280x128xbf16, #tpu.memory_space<vmem>>, vector<128x128xbf16>
    %c1152 = arith.constant 1152 : index
    %c0_3 = arith.constant 0 : index
    %5 = vector.load %arg1[%c1152, %c0_3] : memref<1280x128xbf16, #tpu.memory_space<vmem>>, vector<128x128xbf16>
    %c0_4 = arith.constant 0 : index
    %c0_5 = arith.constant 0 : index
    %6 = vector.load %arg2[%c0_4, %c0_5] : memref<8x128xf32, #tpu.memory_space<vmem>>, vector<1x128xf32>
    %c1_6 = arith.constant 1 : index
    %c0_7 = arith.constant 0 : index
    %7 = vector.load %arg2[%c1_6, %c0_7] : memref<8x128xf32, #tpu.memory_space<vmem>>, vector<1x128xf32>
    %c2_8 = arith.constant 2 : index
    %c0_9 = arith.constant 0 : index
    %8 = vector.load %arg2[%c2_8, %c0_9] : memref<8x128xf32, #tpu.memory_space<vmem>>, vector<1x128xf32>
    %c3 = arith.constant 3 : index
    %c0_10 = arith.constant 0 : index
    %9 = vector.load %arg2[%c3, %c0_10] : memref<8x128xf32, #tpu.memory_space<vmem>>, vector<1x128xf32>
    %c4 = arith.constant 4 : index
    %c0_11 = arith.constant 0 : index
    %10 = vector.load %arg2[%c4, %c0_11] : memref<8x128xf32, #tpu.memory_space<vmem>>, vector<1x128xf32>
    %c0_12 = arith.constant 0 : index
    %c0_13 = arith.constant 0 : index
    %11 = vector.load %arg0[%c0_12, %c0_13] : memref<2x1024xbf16, #tpu.memory_space<vmem>>, vector<2x1024xbf16>
    %cst = arith.constant dense<0.000000e+00> : vector<2x128xf32>
    %12 = tpu.matmul %11, %3, %cst {dimension_numbers = #tpu.dot_dimension_numbers<[1], [0], [0], [1], [0, 0, 1, 1], [], []>} : vector<2x1024xbf16>, vector<1024x128xbf16>, vector<2x128xf32> -> vector<2x128xf32>
    %cst_14 = arith.constant dense<0.000000e+00> : vector<128xf32>
    %13 = vector.multi_reduction <add>, %12, %cst_14 [0] : vector<2x128xf32> to vector<128xf32>
    %14 = vector.shape_cast %13 : vector<128xf32> to vector<1x128xf32>
    %cst_15 = arith.constant 2.000000e+00 : f32
    %15 = vector.broadcast %cst_15 : f32 to vector<1x128xf32>
    %16 = arith.divf %14, %15 : vector<1x128xf32>
    %17 = arith.mulf %12, %12 : vector<2x128xf32>
    %cst_16 = arith.constant dense<0.000000e+00> : vector<128xf32>
    %18 = vector.multi_reduction <add>, %17, %cst_16 [0] : vector<2x128xf32> to vector<128xf32>
    %19 = vector.shape_cast %18 : vector<128xf32> to vector<1x128xf32>
    %cst_17 = arith.constant 2.000000e+00 : f32
    %20 = vector.broadcast %cst_17 : f32 to vector<1x128xf32>
    %21 = arith.divf %19, %20 : vector<1x128xf32>
    %22 = arith.mulf %16, %16 : vector<1x128xf32>
    %23 = arith.subf %21, %22 : vector<1x128xf32>
    %cst_18 = arith.constant 0.000000e+00 : f32
    %24 = vector.broadcast %cst_18 : f32 to vector<1x128xf32>
    %25 = arith.maximumf %23, %24 : vector<1x128xf32>
    %cst_19 = arith.constant 9.99999974E-6 : f32
    %26 = vector.broadcast %cst_19 : f32 to vector<1x128xf32>
    %27 = arith.addf %25, %26 : vector<1x128xf32>
    %28 = math.rsqrt %27 : vector<1x128xf32>
    %29 = arith.mulf %6, %28 : vector<1x128xf32>
    %30 = arith.mulf %16, %29 : vector<1x128xf32>
    %31 = arith.subf %7, %30 : vector<1x128xf32>
    %32 = vector.broadcast %29 : vector<1x128xf32> to vector<2x128xf32>
    %33 = arith.mulf %12, %32 : vector<2x128xf32>
    %34 = vector.broadcast %31 : vector<1x128xf32> to vector<2x128xf32>
    %35 = arith.addf %33, %34 : vector<2x128xf32>
    %cst_20 = arith.constant 0.000000e+00 : f32
    %36 = vector.broadcast %cst_20 : f32 to vector<2x128xf32>
    %37 = arith.maximumf %35, %36 : vector<2x128xf32>
    %38 = arith.mulf %37, %37 : vector<2x128xf32>
    %cst_21 = arith.constant dense<0.000000e+00> : vector<2xf32>
    %39 = vector.multi_reduction <add>, %38, %cst_21 [1] : vector<2x128xf32> to vector<2xf32>
    %40 = vector.shape_cast %39 : vector<2xf32> to vector<2x1xf32>
    %41 = math.sqrt %40 : vector<2x1xf32>
    %42 = vector.broadcast %2 : f32 to vector<2x1xf32>
    %43 = arith.mulf %42, %41 : vector<2x1xf32>
    %cst_22 = arith.constant 0.000000e+00 : f32
    %cst_23 = arith.constant 0.999989986 : f32
    %44 = vector.broadcast %cst_22 : f32 to vector<2x1xf32>
    %45 = arith.maximumf %44, %43 : vector<2x1xf32>
    %46 = vector.broadcast %cst_23 : f32 to vector<2x1xf32>
    %47 = arith.minimumf %46, %45 : vector<2x1xf32>
    %48 = math.log1p %47 : vector<2x1xf32>
    %cst_24 = arith.constant 0.000000e+00 : f32
    %49 = vector.broadcast %cst_24 : f32 to vector<2x1xf32>
    %50 = arith.subf %49, %47 : vector<2x1xf32>
    %51 = math.log1p %50 : vector<2x1xf32>
    %52 = arith.subf %48, %51 : vector<2x1xf32>
    %cst_25 = arith.constant 5.000000e-01 : f32
    %53 = vector.broadcast %cst_25 : f32 to vector<2x1xf32>
    %54 = arith.mulf %53, %52 : vector<2x1xf32>
    %cst_26 = arith.constant 1.000000e-15 : f32
    %55 = vector.broadcast %cst_26 : f32 to vector<2x1xf32>
    %56 = arith.maximumf %43, %55 : vector<2x1xf32>
    %57 = tpu.reciprocal %56 {approx = true} : vector<2x1xf32> -> vector<2x1xf32>
    %58 = arith.mulf %54, %57 : vector<2x1xf32>
    %cst_27 = arith.constant 9.99999974E-5 : f32
    %59 = vector.broadcast %cst_27 : f32 to vector<2x1xf32>
    %60 = arith.cmpf olt, %43, %59 : vector<2x1xf32>
    %cst_28 = arith.constant 1.000000e+00 : f32
    %61 = vector.broadcast %cst_28 : f32 to vector<2x1xf32>
    %62 = arith.select %60, %61, %58 : vector<2x1xi1>, vector<2x1xf32>
    %63 = vector.broadcast %62 : vector<2x1xf32> to vector<2x128xf32>
    %64 = arith.mulf %37, %63 : vector<2x128xf32>
    %65 = arith.truncf %64 : vector<2x128xf32> to vector<2x128xbf16>
    %cst_29 = arith.constant dense<0.000000e+00> : vector<2x128xf32>
    %66 = tpu.matmul %65, %4, %cst_29 {dimension_numbers = #tpu.dot_dimension_numbers<[1], [0], [0], [1], [0, 0, 1, 1], [], []>} : vector<2x128xbf16>, vector<128x128xbf16>, vector<2x128xf32> -> vector<2x128xf32>
    %67 = arith.mulf %66, %66 : vector<2x128xf32>
    %cst_30 = arith.constant dense<0.000000e+00> : vector<2xf32>
    %68 = vector.multi_reduction <add>, %67, %cst_30 [1] : vector<2x128xf32> to vector<2xf32>
    %69 = vector.shape_cast %68 : vector<2xf32> to vector<2x1xf32>
    %70 = math.sqrt %69 : vector<2x1xf32>
    %71 = vector.broadcast %2 : f32 to vector<2x1xf32>
    %72 = arith.mulf %71, %70 : vector<2x1xf32>
    %73 = math.tanh %72 : vector<2x1xf32>
    %cst_31 = arith.constant 1.000000e-15 : f32
    %74 = vector.broadcast %cst_31 : f32 to vector<2x1xf32>
    %75 = arith.maximumf %72, %74 : vector<2x1xf32>
    %76 = tpu.reciprocal %75 {approx = true} : vector<2x1xf32> -> vector<2x1xf32>
    %77 = arith.mulf %73, %76 : vector<2x1xf32>
    %cst_32 = arith.constant 9.99999974E-5 : f32
    %78 = vector.broadcast %cst_32 : f32 to vector<2x1xf32>
    %79 = arith.cmpf olt, %72, %78 : vector<2x1xf32>
    %cst_33 = arith.constant 1.000000e+00 : f32
    %80 = vector.broadcast %cst_33 : f32 to vector<2x1xf32>
    %81 = arith.select %79, %80, %77 : vector<2x1xi1>, vector<2x1xf32>
    %82 = vector.broadcast %81 : vector<2x1xf32> to vector<2x128xf32>
    %83 = arith.mulf %66, %82 : vector<2x128xf32>
    %84 = vector.broadcast %0 : f32 to vector<2x128xf32>
    %85 = arith.mulf %84, %83 : vector<2x128xf32>
    %86 = vector.broadcast %1 : f32 to vector<2x128xf32>
    %87 = arith.mulf %86, %37 : vector<2x128xf32>
    %88 = arith.addf %85, %87 : vector<2x128xf32>
    %cst_34 = arith.constant dense<0.000000e+00> : vector<128xf32>
    %89 = vector.multi_reduction <add>, %88, %cst_34 [0] : vector<2x128xf32> to vector<128xf32>
    %90 = vector.shape_cast %89 : vector<128xf32> to vector<1x128xf32>
    %cst_35 = arith.constant 2.000000e+00 : f32
    %91 = vector.broadcast %cst_35 : f32 to vector<1x128xf32>
    %92 = arith.divf %90, %91 : vector<1x128xf32>
    %93 = arith.mulf %88, %88 : vector<2x128xf32>
    %cst_36 = arith.constant dense<0.000000e+00> : vector<128xf32>
    %94 = vector.multi_reduction <add>, %93, %cst_36 [0] : vector<2x128xf32> to vector<128xf32>
    %95 = vector.shape_cast %94 : vector<128xf32> to vector<1x128xf32>
    %cst_37 = arith.constant 2.000000e+00 : f32
    %96 = vector.broadcast %cst_37 : f32 to vector<1x128xf32>
    %97 = arith.divf %95, %96 : vector<1x128xf32>
    %98 = arith.mulf %92, %92 : vector<1x128xf32>
    %99 = arith.subf %97, %98 : vector<1x128xf32>
    %cst_38 = arith.constant 0.000000e+00 : f32
    %100 = vector.broadcast %cst_38 : f32 to vector<1x128xf32>
    %101 = arith.maximumf %99, %100 : vector<1x128xf32>
    %cst_39 = arith.constant 9.99999974E-6 : f32
    %102 = vector.broadcast %cst_39 : f32 to vector<1x128xf32>
    %103 = arith.addf %101, %102 : vector<1x128xf32>
    %104 = math.rsqrt %103 : vector<1x128xf32>
    %105 = arith.mulf %8, %104 : vector<1x128xf32>
    %106 = arith.mulf %92, %105 : vector<1x128xf32>
    %107 = arith.subf %9, %106 : vector<1x128xf32>
    %108 = vector.broadcast %105 : vector<1x128xf32> to vector<2x128xf32>
    %109 = arith.mulf %88, %108 : vector<2x128xf32>
    %110 = vector.broadcast %107 : vector<1x128xf32> to vector<2x128xf32>
    %111 = arith.addf %109, %110 : vector<2x128xf32>
    %cst_40 = arith.constant 0.000000e+00 : f32
    %112 = vector.broadcast %cst_40 : f32 to vector<2x128xf32>
    %113 = arith.maximumf %111, %112 : vector<2x128xf32>
    %114 = arith.truncf %113 : vector<2x128xf32> to vector<2x128xbf16>
    %cst_41 = arith.constant dense<0.000000e+00> : vector<2x128xf32>
    %115 = tpu.matmul %114, %5, %cst_41 {dimension_numbers = #tpu.dot_dimension_numbers<[1], [0], [0], [1], [0, 0, 1, 1], [], []>} : vector<2x128xbf16>, vector<128x128xbf16>, vector<2x128xf32> -> vector<2x128xf32>
    %116 = vector.broadcast %10 : vector<1x128xf32> to vector<2x128xf32>
    %117 = arith.addf %115, %116 : vector<2x128xf32>
    %c0_42 = arith.constant 0 : index
    %c0_43 = arith.constant 0 : index
    %118 = vector.load %arg4[%c0_42, %c0_43] : memref<2x128xf32, #tpu.memory_space<vmem>>, vector<2x128xf32>
    tpu.vector_store %arg4[%c0_42, %c0_43], %117 {strides = array<i32>} : memref<2x128xf32, #tpu.memory_space<vmem>>, vector<2x128xf32>,
    return
  }
}

</mosaic_0001>

<llo_original>
// kernel: fft_stacked_hb_fourier.1
$region0: #{fft_stacked_hb_fourier.1}
  #allocation0 [shape = 'u32[]', space=smem, size = 0x4, offset = 0x4, fixed_abs, tag = 'smem constant byte address 0x4 - core index']
  #allocation1 [shape = 'u32[72,128]{1,0:T(1,128)}', space=vmem, size = 0x9000, scoped, tag = 'internal scratch']
  %s0 = inlined_call_operand.vmem [shape: bf16[2,1024], index: 0, kind: input, shape index: {}]
  %s1 = inlined_call_operand.hbm [shape: bf16[1280,128], index: 1, kind: input, shape index: {}]
  %s2 = inlined_call_operand.vmem [shape: f32[8,128], index: 2, kind: input, shape index: {}]
  %s3 = inlined_call_operand.vmem [shape: f32[3], index: 3, kind: input, shape index: {}]
  %s4 = inlined_call_operand.hbm [shape: f32[2,128], index: 4, kind: output, shape index: {}]
  %s5 = sld [smem:[#allocation0]]
  $region34: #{fft_stacked_hb_fourier.1} parent=0
    _
  %s7 = ssub.s32 1, %s5
  %s8 = scalar_select 0, %s7, %s5
  $region1: #{fft_stacked_hb_fourier.1} parent=0
    #allocation2 [shape = 'u8[327680]{0}', space=vmem, size = 0x50000, scoped, tag = 'input window, operand 1, single buffered']
    #allocation3 [shape = 's32[1]{0}', space=sflag, size = 0x4, scoped, tag = 'scoped memory for fft_stacked_hb_fourier.1']
    #allocation4 [shape = 's32[1]{0}', space=sflag, size = 0x4, scoped, tag = 'scoped memory for fft_stacked_hb_fourier.1']
    #allocation5 [shape = 's32[1]{0}', space=sflag, size = 0x4, scoped, tag = 'scoped memory for fft_stacked_hb_fourier.1']
    #allocation6 [shape = 'u8[512]{0}', space=smem, size = 0x200, scoped, tag = 'input window, operand 3, single buffered']
    #allocation7 [shape = 'u8[1024]{0}', space=vmem, size = 0x400, scoped, tag = 'output window, operand 0, single buffered']
    %9 = vsyncpa [#allocation3], 0
    %10 = vsyncpa [#allocation5], 0
    %11 = vsyncpa [#allocation4], 0
    // Predicated region
    $region2: #{fft_stacked_hb_fourier.1} parent=1 // pred_check
      _
    $region3: #{fft_stacked_hb_fourier.1} parent=1 // pred_check_branch
      %13 = sbr.rel (0) target = $region5
    $region4: #{fft_stacked_hb_fourier.1} parent=1 // pred_region
      _
    $region5: #{fft_stacked_hb_fourier.1} parent=1 // pred_fallthru
      _
    // Predicated region
    $region6: #{fft_stacked_hb_fourier.1} parent=1 // pred_check
      _
    $region7: #{fft_stacked_hb_fourier.1} parent=1 // pred_check_branch
      %15 = sbr.rel (0) target = $region9
    $region8: #{fft_stacked_hb_fourier.1} parent=1 // pred_region
      %17 = vsyncadd [#allocation3], 0
      %s18 = sshll.u32 %s1, 4
      %s19 = int_to_ptr.hbm [resolvable:$true] %s18
      %s20 = sshll.u32 [#allocation2], 4
      %s21 = int_to_ptr.vmem [resolvable:$true] %s20
      %26 = dma.hbm_to_vmem [thread:$0]  %s19, 10240, %s21, [#allocation3], 64, 64, 4
    $region9: #{fft_stacked_hb_fourier.1} parent=1 // pred_fallthru
      _
    // Predicated region
    $region10: #{fft_stacked_hb_fourier.1} parent=1 // pred_check
      _
    $region11: #{fft_stacked_hb_fourier.1} parent=1 // pred_check_branch
      %28 = sbr.rel (0) target = $region13
    $region12: #{fft_stacked_hb_fourier.1} parent=1 // pred_region
      _
    $region13: #{fft_stacked_hb_fourier.1} parent=1 // pred_fallthru
      _
    // Predicated region
    $region14: #{fft_stacked_hb_fourier.1} parent=1 // pred_check
      _
    $region15: #{fft_stacked_hb_fourier.1} parent=1 // pred_check_branch
      %30 = sbr.rel (0) target = $region17
    $region16: #{fft_stacked_hb_fourier.1} parent=1 // pred_region
      %32 = vsyncadd [#allocation5], 0
      %s34 = sshll.u32 %s3, 4
      %s35 = int_to_ptr.vmem [resolvable:$true] %s34
      %37 = dma.vmem_to_smem %s35, 16, [#allocation6], [#allocation5]
    $region17: #{fft_stacked_hb_fourier.1} parent=1 // pred_fallthru
      _
    // Predicated region
    $region18: #{fft_stacked_hb_fourier.1} parent=1 // pred_check
      _
    $region19: #{fft_stacked_hb_fourier.1} parent=1 // pred_check_branch
      %39 = sbr.rel (0) target = $region21
    $region20: #{fft_stacked_hb_fourier.1} parent=1 // pred_region
      %41 = dma.done [#allocation3], 10240
    $region21: #{fft_stacked_hb_fourier.1} parent=1 // pred_fallthru
      _
    // Predicated region
    $region22: #{fft_stacked_hb_fourier.1} parent=1 // pred_check
      _
    $region23: #{fft_stacked_hb_fourier.1} parent=1 // pred_check_branch
      %43 = sbr.rel (0) target = $region25
    $region24: #{fft_stacked_hb_fourier.1} parent=1 // pred_region
      %45 = dma.done [#allocation5], 16
    $region25: #{fft_stacked_hb_fourier.1} parent=1 // pred_fallthru
      _
    %46 = sfence
    %s47 = sld [smem:[#allocation6]]
    %s48 = sld [smem:[#allocation6 + $0x1]]
    %s49 = sld [smem:[#allocation6 + $0x2]]
    %v50 = vld [vmem:[#allocation2] sm:$0xf]
    %v51 = vld [vmem:[#allocation2 + $0x4] sm:$0xf]
    %v52 = vld [vmem:[#allocation2 + $0x8] sm:$0xf]
    %v53 = vld [vmem:[#allocation2 + $0xc] sm:$0xf]
    %v54 = vld [vmem:[#allocation2 + $0x10] sm:$0xf]
    %v55 = vld [vmem:[#allocation2 + $0x14] sm:$0xf]
    %v56 = vld [vmem:[#allocation2 + $0x18] sm:$0xf]
    %v57 = vld [vmem:[#allocation2 + $0x1c] sm:$0xf]
    %v58 = vld [vmem:[#allocation2 + $0x20] sm:$0xf]
    %v59 = vld [vmem:[#allocation2 + $0x24] sm:$0xf]
    %v60 = vld [vmem:[#allocation2 + $0x28] sm:$0xf]
    %v61 = vld [vmem:[#allocation2 + $0x2c] sm:$0xf]
    %v62 = vld [vmem:[#allocation2 + $0x30] sm:$0xf]
    %v63 = vld [vmem:[#allocation2 + $0x34] sm:$0xf]
    %v64 = vld [vmem:[#allocation2 + $0x38] sm:$0xf]
    %v65 = vld [vmem:[#allocation2 + $0x3c] sm:$0xf]
    %v66 = vld [vmem:[#allocation2 + $0x40] sm:$0xf]
    %v67 = vld [vmem:[#allocation2 + $0x44] sm:$0xf]
    %v68 = vld [vmem:[#allocation2 + $0x48] sm:$0xf]
    %v69 = vld [vmem:[#allocation2 + $0x4c] sm:$0xf]
    %v70 = vld [vmem:[#allocation2 + $0x50] sm:$0xf]
    %v71 = vld [vmem:[#allocation2 + $0x54] sm:$0xf]
    %v72 = vld [vmem:[#allocation2 + $0x58] sm:$0xf]
    %v73 = vld [vmem:[#allocation2 + $0x5c] sm:$0xf]
    %v74 = vld [vmem:[#allocation2 + $0x60] sm:$0xf]
    %v75 = vld [vmem:[#allocation2 + $0x64] sm:$0xf]
    %v76 = vld [vmem:[#allocation2 + $0x68] sm:$0xf]
    %v77 = vld [vmem:[#allocation2 + $0x6c] sm:$0xf]
    %v78 = vld [vmem:[#allocation2 + $0x70] sm:$0xf]
    %v79 = vld [vmem:[#allocation2 + $0x74] sm:$0xf]
    %v80 = vld [vmem:[#allocation2 + $0x78] sm:$0xf]
    %v81 = vld [vmem:[#allocation2 + $0x7c] sm:$0xf]
    %v82 = vld [vmem:[#allocation2 + $0x80] sm:$0xf]
    %v83 = vld [vmem:[#allocation2 + $0x84] sm:$0xf]
    %v84 = vld [vmem:[#allocation2 + $0x88] sm:$0xf]
    %v85 = vld [vmem:[#allocation2 + $0x8c] sm:$0xf]
    %v86 = vld [vmem:[#allocation2 + $0x90] sm:$0xf]
    %v87 = vld [vmem:[#allocation2 + $0x94] sm:$0xf]
    %v88 = vld [vmem:[#allocation2 + $0x98] sm:$0xf]
    %v89 = vld [vmem:[#allocation2 + $0x9c] sm:$0xf]
    %v90 = vld [vmem:[#allocation2 + $0xa0] sm:$0xf]
    %v91 = vld [vmem:[#allocation2 + $0xa4] sm:$0xf]
    %v92 = vld [vmem:[#allocation2 + $0xa8] sm:$0xf]
    %v93 = vld [vmem:[#allocation2 + $0xac] sm:$0xf]
    %v94 = vld [vmem:[#allocation2 + $0xb0] sm:$0xf]
    %v95 = vld [vmem:[#allocation2 + $0xb4] sm:$0xf]
    %v96 = vld [vmem:[#allocation2 + $0xb8] sm:$0xf]
    %v97 = vld [vmem:[#allocation2 + $0xbc] sm:$0xf]
    %v98 = vld [vmem:[#allocation2 + $0xc0] sm:$0xf]
    %v99 = vld [vmem:[#allocation2 + $0xc4] sm:$0xf]
    %v100 = vld [vmem:[#allocation2 + $0xc8] sm:$0xf]
    %v101 = vld [vmem:[#allocation2 + $0xcc] sm:$0xf]
    %v102 = vld [vmem:[#allocation2 + $0xd0] sm:$0xf]
    %v103 = vld [vmem:[#allocation2 + $0xd4] sm:$0xf]
    %v104 = vld [vmem:[#allocation2 + $0xd8] sm:$0xf]
    %v105 = vld [vmem:[#allocation2 + $0xdc] sm:$0xf]
    %v106 = vld [vmem:[#allocation2 + $0xe0] sm:$0xf]
    %v107 = vld [vmem:[#allocation2 + $0xe4] sm:$0xf]
    %v108 = vld [vmem:[#allocation2 + $0xe8] sm:$0xf]
    %v109 = vld [vmem:[#allocation2 + $0xec] sm:$0xf]
    %v110 = vld [vmem:[#allocation2 + $0xf0] sm:$0xf]
    %v111 = vld [vmem:[#allocation2 + $0xf4] sm:$0xf]
    %v112 = vld [vmem:[#allocation2 + $0xf8] sm:$0xf]
    %v113 = vld [vmem:[#allocation2 + $0xfc] sm:$0xf]
    %v114 = vld [vmem:[#allocation2 + $0x100] sm:$0xf]
    %v115 = vld [vmem:[#allocation2 + $0x104] sm:$0xf]
    %v116 = vld [vmem:[#allocation2 + $0x108] sm:$0xf]
    %v117 = vld [vmem:[#allocation2 + $0x10c] sm:$0xf]
    %v118 = vld [vmem:[#allocation2 + $0x110] sm:$0xf]
    %v119 = vld [vmem:[#allocation2 + $0x114] sm:$0xf]
    %v120 = vld [vmem:[#allocation2 + $0x118] sm:$0xf]
    %v121 = vld [vmem:[#allocation2 + $0x11c] sm:$0xf]
    %v122 = vld [vmem:[#allocation2 + $0x120] sm:$0xf]
    %v123 = vld [vmem:[#allocation2 + $0x124] sm:$0xf]
    %v124 = vld [vmem:[#allocation2 + $0x128] sm:$0xf]
    %v125 = vld [vmem:[#allocation2 + $0x12c] sm:$0xf]
    %v126 = vld [vmem:[#allocation2 + $0x130] sm:$0xf]
    %v127 = vld [vmem:[#allocation2 + $0x134] sm:$0xf]
    %v128 = vld [vmem:[#allocation2 + $0x138] sm:$0xf]
    %v129 = vld [vmem:[#allocation2 + $0x13c] sm:$0xf]
    %v130 = vld [vmem:[#allocation2 + $0x140] sm:$0xf]
    %v131 = vld [vmem:[#allocation2 + $0x144] sm:$0xf]
    %v132 = vld [vmem:[#allocation2 + $0x148] sm:$0xf]
    %v133 = vld [vmem:[#allocation2 + $0x14c] sm:$0xf]
    %v134 = vld [vmem:[#allocation2 + $0x150] sm:$0xf]
    %v135 = vld [vmem:[#allocation2 + $0x154] sm:$0xf]
    %v136 = vld [vmem:[#allocation2 + $0x158] sm:$0xf]
    %v137 = vld [vmem:[#allocation2 + $0x15c] sm:$0xf]
    %v138 = vld [vmem:[#allocation2 + $0x160] sm:$0xf]
    %v139 = vld [vmem:[#allocation2 + $0x164] sm:$0xf]
    %v140 = vld [vmem:[#allocation2 + $0x168] sm:$0xf]
    %v141 = vld [vmem:[#allocation2 + $0x16c] sm:$0xf]
    %v142 = vld [vmem:[#allocation2 + $0x170] sm:$0xf]
    %v143 = vld [vmem:[#allocation2 + $0x174] sm:$0xf]
    %v144 = vld [vmem:[#allocation2 + $0x178] sm:$0xf]
    %v145 = vld [vmem:[#allocation2 + $0x17c] sm:$0xf]
    %v146 = vld [vmem:[#allocation2 + $0x180] sm:$0xf]
    %v147 = vld [vmem:[#allocation2 + $0x184] sm:$0xf]
    %v148 = vld [vmem:[#allocation2 + $0x188] sm:$0xf]
    %v149 = vld [vmem:[#allocation2 + $0x18c] sm:$0xf]
    %v150 = vld [vmem:[#allocation2 + $0x190] sm:$0xf]
    %v151 = vld [vmem:[#allocation2 + $0x194] sm:$0xf]
    %v152 = vld [vmem:[#allocation2 + $0x198] sm:$0xf]
    %v153 = vld [vmem:[#allocation2 + $0x19c] sm:$0xf]
    %v154 = vld [vmem:[#allocation2 + $0x1a0] sm:$0xf]
    %v155 = vld [vmem:[#allocation2 + $0x1a4] sm:$0xf]
    %v156 = vld [vmem:[#allocation2 + $0x1a8] sm:$0xf]
    %v157 = vld [vmem:[#allocation2 + $0x1ac] sm:$0xf]
    %v158 = vld [vmem:[#allocation2 + $0x1b0] sm:$0xf]
    %v159 = vld [vmem:[#allocation2 + $0x1b4] sm:$0xf]
    %v160 = vld [vmem:[#allocation2 + $0x1b8] sm:$0xf]
    %v161 = vld [vmem:[#allocation2 + $0x1bc] sm:$0xf]
    %v162 = vld [vmem:[#allocation2 + $0x1c0] sm:$0xf]
    %v163 = vld [vmem:[#allocation2 + $0x1c4] sm:$0xf]
    %v164 = vld [vmem:[#allocation2 + $0x1c8] sm:$0xf]
    %v165 = vld [vmem:[#allocation2 + $0x1cc] sm:$0xf]
    %v166 = vld [vmem:[#allocation2 + $0x1d0] sm:$0xf]
    %v167 = vld [vmem:[#allocation2 + $0x1d4] sm:$0xf]
    %v168 = vld [vmem:[#allocation2 + $0x1d8] sm:$0xf]
    %v169 = vld [vmem:[#allocation2 + $0x1dc] sm:$0xf]
    %v170 = vld [vmem:[#allocation2 + $0x1e0] sm:$0xf]
    %v171 = vld [vmem:[#allocation2 + $0x1e4] sm:$0xf]
    %v172 = vld [vmem:[#allocation2 + $0x1e8] sm:$0xf]
    %v173 = vld [vmem:[#allocation2 + $0x1ec] sm:$0xf]
    %v174 = vld [vmem:[#allocation2 + $0x1f0] sm:$0xf]
    %v175 = vld [vmem:[#allocation2 + $0x1f4] sm:$0xf]
    %v176 = vld [vmem:[#allocation2 + $0x1f8] sm:$0xf]
    %v177 = vld [vmem:[#allocation2 + $0x1fc] sm:$0xf]
    %v178 = vld [vmem:[#allocation2 + $0x200] sm:$0xf]
    %v179 = vld [vmem:[#allocation2 + $0x204] sm:$0xf]
    %v180 = vld [vmem:[#allocation2 + $0x208] sm:$0xf]
    %v181 = vld [vmem:[#allocation2 + $0x20c] sm:$0xf]
    %v182 = vld [vmem:[#allocation2 + $0x210] sm:$0xf]
    %v183 = vld [vmem:[#allocation2 + $0x214] sm:$0xf]
    %v184 = vld [vmem:[#allocation2 + $0x218] sm:$0xf]
    %v185 = vld [vmem:[#allocation2 + $0x21c] sm:$0xf]
    %v186 = vld [vmem:[#allocation2 + $0x220] sm:$0xf]
    %v187 = vld [vmem:[#allocation2 + $0x224] sm:$0xf]
    %v188 = vld [vmem:[#allocation2 + $0x228] sm:$0xf]
    %v189 = vld [vmem:[#allocation2 + $0x22c] sm:$0xf]
    %v190 = vld [vmem:[#allocation2 + $0x230] sm:$0xf]
    %v191 = vld [vmem:[#allocation2 + $0x234] sm:$0xf]
    %v192 = vld [vmem:[#allocation2 + $0x238] sm:$0xf]
    %v193 = vld [vmem:[#allocation2 + $0x23c] sm:$0xf]
    %v194 = vld [vmem:[#allocation2 + $0x240] sm:$0xf]
    %v195 = vld [vmem:[#allocation2 + $0x244] sm:$0xf]
    %v196 = vld [vmem:[#allocation2 + $0x248] sm:$0xf]
    %v197 = vld [vmem:[#allocation2 + $0x24c] sm:$0xf]
    %v198 = vld [vmem:[#allocation2 + $0x250] sm:$0xf]
    %v199 = vld [vmem:[#allocation2 + $0x254] sm:$0xf]
    %v200 = vld [vmem:[#allocation2 + $0x258] sm:$0xf]
    %v201 = vld [vmem:[#allocation2 + $0x25c] sm:$0xf]
    %v202 = vld [vmem:[#allocation2 + $0x260] sm:$0xf]
    %v203 = vld [vmem:[#allocation2 + $0x264] sm:$0xf]
    %v204 = vld [vmem:[#allocation2 + $0x268] sm:$0xf]
    %v205 = vld [vmem:[#allocation2 + $0x26c] sm:$0xf]
    %v206 = vld [vmem:[#allocation2 + $0x270] sm:$0xf]
    %v207 = vld [vmem:[#allocation2 + $0x274] sm:$0xf]
    %v208 = vld [vmem:[#allocation2 + $0x278] sm:$0xf]
    %v209 = vld [vmem:[#allocation2 + $0x27c] sm:$0xf]
    %v210 = vld [vmem:[%s2] sm:$0x1]
    %v211 = vld [vmem:[%s2 + $0x1] sm:$0x1]
    %v212 = vld [vmem:[%s2 + $0x2] sm:$0x1]
    %v213 = vld [vmem:[%s2 + $0x3] sm:$0x1]
    %v214 = vld [vmem:[%s2 + $0x4] sm:$0x1]
    %v215 = vld [vmem:[%s0] sm:$0xff]
    %217 = vst [vmem:[#allocation1] ss:$9 sm:$0xff] %v215
    %v218 = vld [vmem:[#allocation1] sm:$0xff]
    %v219 = vld [vmem:[#allocation1 + $0x9] sm:$0xff]
    %v220 = vld [vmem:[#allocation1 + $0x12] sm:$0xff]
    %v221 = vld [vmem:[#allocation1 + $0x1b] sm:$0xff]
    %v222 = vld [vmem:[#allocation1 + $0x24] sm:$0xff]
    %v223 = vld [vmem:[#allocation1 + $0x2d] sm:$0xff]
    %v224 = vld [vmem:[#allocation1 + $0x36] sm:$0xff]
    %v225 = vld [vmem:[#allocation1 + $0x3f] sm:$0xff]
    %v362 = vunpack.c.l.b16 %v50
    %v363 = vunpack.c.l.b16 %v51
    %v364 = vunpack.c.l.b16 %v52
    %v365 = vunpack.c.l.b16 %v53
    %v366 = vunpack.c.l.b16 %v54
    %v367 = vunpack.c.l.b16 %v55
    %v368 = vunpack.c.l.b16 %v56
    %v369 = vunpack.c.l.b16 %v57
    %v370 = vunpack.c.l.b16 %v58
    %v371 = vunpack.c.l.b16 %v59
    %v372 = vunpack.c.l.b16 %v60
    %v373 = vunpack.c.l.b16 %v61
    %v374 = vunpack.c.l.b16 %v62
    %v375 = vunpack.c.l.b16 %v63
    %v376 = vunpack.c.l.b16 %v64
    %v377 = vunpack.c.l.b16 %v65
    %v378 = vunpack.c.l.b16 %v66
    %v379 = vunpack.c.l.b16 %v67
    %v380 = vunpack.c.l.b16 %v68
    %v381 = vunpack.c.l.b16 %v69
    %v382 = vunpack.c.l.b16 %v70
    %v383 = vunpack.c.l.b16 %v71
    %v384 = vunpack.c.l.b16 %v72
    %v385 = vunpack.c.l.b16 %v73
    %v386 = vunpack.c.l.b16 %v74
    %v387 = vunpack.c.l.b16 %v75
    %v388 = vunpack.c.l.b16 %v76
    %v389 = vunpack.c.l.b16 %v77
    %v390 = vunpack.c.l.b16 %v78
    %v391 = vunpack.c.l.b16 %v79
    %v392 = vunpack.c.l.b16 %v80
    %v393 = vunpack.c.l.b16 %v81
    %v394 = vunpack.c.l.b16 %v82
    %v395 = vunpack.c.l.b16 %v83
    %v396 = vunpack.c.l.b16 %v84
    %v397 = vunpack.c.l.b16 %v85
    %v398 = vunpack.c.l.b16 %v86
    %v399 = vunpack.c.l.b16 %v87
    %v400 = vunpack.c.l.b16 %v88
    %v401 = vunpack.c.l.b16 %v89
    %v402 = vunpack.c.l.b16 %v90
    %v403 = vunpack.c.l.b16 %v91
    %v404 = vunpack.c.l.b16 %v92
    %v405 = vunpack.c.l.b16 %v93
    %v406 = vunpack.c.l.b16 %v94
    %v407 = vunpack.c.l.b16 %v95
    %v408 = vunpack.c.l.b16 %v96
    %v409 = vunpack.c.l.b16 %v97
    %v410 = vunpack.c.l.b16 %v98
    %v411 = vunpack.c.l.b16 %v99
    %v412 = vunpack.c.l.b16 %v100
    %v413 = vunpack.c.l.b16 %v101
    %v414 = vunpack.c.l.b16 %v102
    %v415 = vunpack.c.l.b16 %v103
    %v416 = vunpack.c.l.b16 %v104
    %v417 = vunpack.c.l.b16 %v105
    %v418 = vunpack.c.l.b16 %v106
    %v419 = vunpack.c.l.b16 %v107
    %v420 = vunpack.c.l.b16 %v108
    %v421 = vunpack.c.l.b16 %v109
    %v422 = vunpack.c.l.b16 %v110
    %v423 = vunpack.c.l.b16 %v111
    %v424 = vunpack.c.l.b16 %v112
    %v425 = vunpack.c.l.b16 %v113
    %v426 = vunpack.c.l.b16 %v114
    %v427 = vunpack.c.l.b16 %v115
    %v428 = vunpack.c.l.b16 %v116
    %v429 = vunpack.c.l.b16 %v117
    %v430 = vunpack.c.l.b16 %v118
    %v431 = vunpack.c.l.b16 %v119
    %v432 = vunpack.c.l.b16 %v120
    %v433 = vunpack.c.l.b16 %v121
    %v434 = vunpack.c.l.b16 %v122
    %v435 = vunpack.c.l.b16 %v123
    %v436 = vunpack.c.l.b16 %v124
    %v437 = vunpack.c.l.b16 %v125
    %v438 = vunpack.c.l.b16 %v126
    %v439 = vunpack.c.l.b16 %v127
    %v440 = vunpack.c.l.b16 %v128
    %v441 = vunpack.c.l.b16 %v129
    %v442 = vunpack.c.l.b16 %v130
    %v443 = vunpack.c.l.b16 %v131
    %v444 = vunpack.c.l.b16 %v132
    %v445 = vunpack.c.l.b16 %v133
    %v446 = vunpack.c.l.b16 %v134
    %v447 = vunpack.c.l.b16 %v135
    %v448 = vunpack.c.l.b16 %v136
    %v449 = vunpack.c.l.b16 %v137
    %v450 = vunpack.c.l.b16 %v138
    %v451 = vunpack.c.l.b16 %v139
    %v452 = vunpack.c.l.b16 %v140
    %v453 = vunpack.c.l.b16 %v141
    %v454 = vunpack.c.l.b16 %v142
    %v455 = vunpack.c.l.b16 %v143
    %v456 = vunpack.c.l.b16 %v144
    %v457 = vunpack.c.l.b16 %v145
    %v458 = vunpack.c.l.b16 %v146
    %v459 = vunpack.c.l.b16 %v147
    %v460 = vunpack.c.l.b16 %v148
    %v461 = vunpack.c.l.b16 %v149
    %v462 = vunpack.c.l.b16 %v150
    %v463 = vunpack.c.l.b16 %v151
    %v464 = vunpack.c.l.b16 %v152
    %v465 = vunpack.c.l.b16 %v153
    %v466 = vunpack.c.l.b16 %v154
    %v467 = vunpack.c.l.b16 %v155
    %v468 = vunpack.c.l.b16 %v156
    %v469 = vunpack.c.l.b16 %v157
    %v470 = vunpack.c.l.b16 %v158
    %v471 = vunpack.c.l.b16 %v159
    %v472 = vunpack.c.l.b16 %v160
    %v473 = vunpack.c.l.b16 %v161
    %v474 = vunpack.c.l.b16 %v162
    %v475 = vunpack.c.l.b16 %v163
    %v476 = vunpack.c.l.b16 %v164
    %v477 = vunpack.c.l.b16 %v165
    %v478 = vunpack.c.l.b16 %v166
    %v479 = vunpack.c.l.b16 %v167
    %v480 = vunpack.c.l.b16 %v168
    %v481 = vunpack.c.l.b16 %v169
    %v482 = vunpack.c.l.b16 %v170
    %v483 = vunpack.c.l.b16 %v171
    %v484 = vunpack.c.l.b16 %v172
    %v485 = vunpack.c.l.b16 %v173
    %v486 = vunpack.c.l.b16 %v174
    %v487 = vunpack.c.l.b16 %v175
    %v488 = vunpack.c.l.b16 %v176
    %v489 = vunpack.c.l.b16 %v177
    %v490 = vpack.c.b16 %v363, %v362
    %v491 = vpack.c.b16 %v365, %v364
    %v492 = vpack.c.b16 %v367, %v366
    %v493 = vpack.c.b16 %v369, %v368
    %v494 = vpack.c.b16 %v371, %v370
    %v495 = vpack.c.b16 %v373, %v372
    %v496 = vpack.c.b16 %v375, %v374
    %v497 = vpack.c.b16 %v377, %v376
    %v498 = vpack.c.b16 %v379, %v378
    %v499 = vpack.c.b16 %v381, %v380
    %v500 = vpack.c.b16 %v383, %v382
    %v501 = vpack.c.b16 %v385, %v384
    %v502 = vpack.c.b16 %v387, %v386
    %v503 = vpack.c.b16 %v389, %v388
    %v504 = vpack.c.b16 %v391, %v390
    %v505 = vpack.c.b16 %v393, %v392
    %v506 = vpack.c.b16 %v395, %v394
    %v507 = vpack.c.b16 %v397, %v396
    %v508 = vpack.c.b16 %v399, %v398
    %v509 = vpack.c.b16 %v401, %v400
    %v510 = vpack.c.b16 %v403, %v402
    %v511 = vpack.c.b16 %v405, %v404
    %v512 = vpack.c.b16 %v407, %v406
    %v513 = vpack.c.b16 %v409, %v408
    %v514 = vpack.c.b16 %v411, %v410
    %v515 = vpack.c.b16 %v413, %v412
    %v516 = vpack.c.b16 %v415, %v414
    %v517 = vpack.c.b16 %v417, %v416
    %v518 = vpack.c.b16 %v419, %v418
    %v519 = vpack.c.b16 %v421, %v420
    %v520 = vpack.c.b16 %v423, %v422
    %v521 = vpack.c.b16 %v425, %v424
    %v522 = vpack.c.b16 %v427, %v426
    %v523 = vpack.c.b16 %v429, %v428
    %v524 = vpack.c.b16 %v431, %v430
    %v525 = vpack.c.b16 %v433, %v432
    %v526 = vpack.c.b16 %v435, %v434
    %v527 = vpack.c.b16 %v437, %v436
    %v528 = vpack.c.b16 %v439, %v438
    %v529 = vpack.c.b16 %v441, %v440
    %v530 = vpack.c.b16 %v443, %v442
    %v531 = vpack.c.b16 %v445, %v444
    %v532 = vpack.c.b16 %v447, %v446
    %v533 = vpack.c.b16 %v449, %v448
    %v534 = vpack.c.b16 %v451, %v450
    %v535 = vpack.c.b16 %v453, %v452
    %v536 = vpack.c.b16 %v455, %v454
    %v537 = vpack.c.b16 %v457, %v456
    %v538 = vpack.c.b16 %v459, %v458
    %v539 = vpack.c.b16 %v461, %v460
    %v540 = vpack.c.b16 %v463, %v462
    %v541 = vpack.c.b16 %v465, %v464
    %v542 = vpack.c.b16 %v467, %v466
    %v543 = vpack.c.b16 %v469, %v468
    %v544 = vpack.c.b16 %v471, %v470
    %v545 = vpack.c.b16 %v473, %v472
    %v546 = vpack.c.b16 %v475, %v474
    %v547 = vpack.c.b16 %v477, %v476
    %v548 = vpack.c.b16 %v479, %v478
    %v549 = vpack.c.b16 %v481, %v480
    %v550 = vpack.c.b16 %v483, %v482
    %v551 = vpack.c.b16 %v485, %v484
    %v552 = vpack.c.b16 %v487, %v486
    %v553 = vpack.c.b16 %v489, %v488
    %618 = vmatpush.bf16.msra.mxu0 %v497
    %619 = vmatpush.bf16.msra.mxu0 %v496
    %620 = vmatpush.bf16.msra.mxu0 %v495
    %621 = vmatpush.bf16.msra.mxu0 %v494
    %622 = vmatpush.bf16.msra.mxu0 %v493
    %623 = vmatpush.bf16.msra.mxu0 %v492
    %624 = vmatpush.bf16.msra.mxu0 %v491
    %625 = vmatpush.bf16.msra.mxu0 %v490
    %626 = vmatmul.bf16.gmra.mxu0 %v218
    %v627 = vpop.f32.mrf.mxu0
    %v628 = vadd.f32 0.0, %v627
    %v629 = vpop.f32.mrf.mxu0
    %630 = vdwg.mxu0
    %631 = vmatpush.bf16.msra.mxu0 %v505
    %632 = vmatpush.bf16.msra.mxu0 %v504
    %633 = vmatpush.bf16.msra.mxu0 %v503
    %634 = vmatpush.bf16.msra.mxu0 %v502
    %635 = vmatpush.bf16.msra.mxu0 %v501
    %636 = vmatpush.bf16.msra.mxu0 %v500
    %637 = vmatpush.bf16.msra.mxu0 %v499
    %638 = vmatpush.bf16.msra.mxu0 %v498
    %639 = vmatmul.bf16.gmra.mxu0 %v219
    %v640 = vpop.f32.mrf.mxu0
    %v641 = vadd.f32 %v628, %v640
    %v642 = vpop.f32.mrf.mxu0
    %643 = vdwg.mxu0
    %644 = vmatpush.bf16.msra.mxu0 %v513
    %645 = vmatpush.bf16.msra.mxu0 %v512
    %646 = vmatpush.bf16.msra.mxu0 %v511
    %647 = vmatpush.bf16.msra.mxu0 %v510
    %648 = vmatpush.bf16.msra.mxu0 %v509
    %649 = vmatpush.bf16.msra.mxu0 %v508
    %650 = vmatpush.bf16.msra.mxu0 %v507
    %651 = vmatpush.bf16.msra.mxu0 %v506
    %652 = vmatmul.bf16.gmra.mxu0 %v220
    %v653 = vpop.f32.mrf.mxu0
    %v654 = vadd.f32 %v641, %v653
    %v655 = vpop.f32.mrf.mxu0
    %656 = vdwg.mxu0
    %657 = vmatpush.bf16.msra.mxu0 %v521
    %658 = vmatpush.bf16.msra.mxu0 %v520
    %659 = vmatpush.bf16.msra.mxu0 %v519
    %660 = vmatpush.bf16.msra.mxu0 %v518
    %661 = vmatpush.bf16.msra.mxu0 %v517
    %662 = vmatpush.bf16.msra.mxu0 %v516
    %663 = vmatpush.bf16.msra.mxu0 %v515
    %664 = vmatpush.bf16.msra.mxu0 %v514
    %665 = vmatmul.bf16.gmra.mxu0 %v221
    %v666 = vpop.f32.mrf.mxu0
    %v667 = vadd.f32 %v654, %v666
    %v668 = vpop.f32.mrf.mxu0
    %669 = vdwg.mxu0
    %670 = vmatpush.bf16.msra.mxu0 %v529
    %671 = vmatpush.bf16.msra.mxu0 %v528
    %672 = vmatpush.bf16.msra.mxu0 %v527
    %673 = vmatpush.bf16.msra.mxu0 %v526
    %674 = vmatpush.bf16.msra.mxu0 %v525
    %675 = vmatpush.bf16.msra.mxu0 %v524
    %676 = vmatpush.bf16.msra.mxu0 %v523
    %677 = vmatpush.bf16.msra.mxu0 %v522
    %678 = vmatmul.bf16.gmra.mxu0 %v222
    %v679 = vpop.f32.mrf.mxu0
    %v680 = vadd.f32 %v667, %v679
    %v681 = vpop.f32.mrf.mxu0
    %682 = vdwg.mxu0
    %683 = vmatpush.bf16.msra.mxu0 %v537
    %684 = vmatpush.bf16.msra.mxu0 %v536
    %685 = vmatpush.bf16.msra.mxu0 %v535
    %686 = vmatpush.bf16.msra.mxu0 %v534
    %687 = vmatpush.bf16.msra.mxu0 %v533
    %688 = vmatpush.bf16.msra.mxu0 %v532
    %689 = vmatpush.bf16.msra.mxu0 %v531
    %690 = vmatpush.bf16.msra.mxu0 %v530
    %691 = vmatmul.bf16.gmra.mxu0 %v223
    %v692 = vpop.f32.mrf.mxu0
    %v693 = vadd.f32 %v680, %v692
    %v694 = vpop.f32.mrf.mxu0
    %695 = vdwg.mxu0
    %696 = vmatpush.bf16.msra.mxu0 %v545
    %697 = vmatpush.bf16.msra.mxu0 %v544
    %698 = vmatpush.bf16.msra.mxu0 %v543
    %699 = vmatpush.bf16.msra.mxu0 %v542
    %700 = vmatpush.bf16.msra.mxu0 %v541
    %701 = vmatpush.bf16.msra.mxu0 %v540
    %702 = vmatpush.bf16.msra.mxu0 %v539
    %703 = vmatpush.bf16.msra.mxu0 %v538
    %704 = vmatmul.bf16.gmra.mxu0 %v224
    %v705 = vpop.f32.mrf.mxu0
    %v706 = vadd.f32 %v693, %v705
    %v707 = vpop.f32.mrf.mxu0
    %708 = vdwg.mxu0
    %709 = vmatpush.bf16.msra.mxu0 %v553
    %710 = vmatpush.bf16.msra.mxu0 %v552
    %711 = vmatpush.bf16.msra.mxu0 %v551
    %712 = vmatpush.bf16.msra.mxu0 %v550
    %713 = vmatpush.bf16.msra.mxu0 %v549
    %714 = vmatpush.bf16.msra.mxu0 %v548
    %715 = vmatpush.bf16.msra.mxu0 %v547
    %716 = vmatpush.bf16.msra.mxu0 %v546
    %717 = vmatmul.bf16.gmra.mxu0 %v225
    %v718 = vpop.f32.mrf.mxu0
    %v719 = vadd.f32 %v706, %v718
    %v720 = vpop.f32.mrf.mxu0
    %721 = vdwg.mxu0
    %vm722 = vcmask 1041408
    %v723 = vsel %vm722, %v719, 0.0
    %v724 = vrot.slane %v723, 4
    %v725 = vadd.f32 %v723, %v724
    %v726 = vrot.slane %v725, 2
    %v727 = vadd.f32 %v725, %v726
    %v728 = vrot.slane %v727, 1
    %v729 = vadd.f32 %v727, %v728
    %v730 = vrcp.pop 2.0
    %v731 = vmul.f32 2.0, %v730
    %v732 = vsub.f32 1.0, %v731
    %v733 = vmul.f32 %v730, %v732
    %v734 = vadd.f32 %v730, %v733
    %vm735 = vweird.f32 %v730
    %v736 = vsel %vm735, %v730, %v734
    %v737 = vmul.f32 %v729, %v736
    %v738 = vmul.f32 %v719, %v719
    %v739 = vsel %vm722, %v738, 0.0
    %v740 = vrot.slane %v739, 4
    %v741 = vadd.f32 %v739, %v740
    %v742 = vrot.slane %v741, 2
    %v743 = vadd.f32 %v741, %v742
    %v744 = vrot.slane %v743, 1
    %v745 = vadd.f32 %v743, %v744
    %v746 = vmul.f32 %v745, %v736
    %v747 = vmul.f32 %v737, %v737
    %v748 = vsub.f32 %v746, %v747
    %v749 = vmax.f32 %v748, 0.0
    %v750 = vadd.f32 %v749, 1e-05
    %v751 = vrsqrt.pop %v750
    %v752 = vmul.f32 %v751, %v750
    %v753 = vmul.f32 %v752, %v751
    %v754 = vmul.f32 0.5, %v753
    %v755 = vsub.f32 1.5, %v754
    %v756 = vmul.f32 %v751, %v755
    %vm757 = vweird.f32 %v750
    %vm758 = vweird.f32 %v751
    %vm759 = vmor %vm757, %vm758
    %v760 = vsel %vm759, %v751, %v756
    %v761 = vmul.f32 %v210, %v760
    %v762 = vmul.f32 %v737, %v761
    %v763 = vsub.f32 %v211, %v762
    %v764 = vperm.slane %v761, 0
    %v765 = vmul.f32 %v719, %v764
    %v766 = vperm.slane %v763, 0
    %v767 = vadd.f32 %v765, %v766
    %v768 = vmax.f32 %v767, 0.0
    %v769 = vmul.f32 %v768, %v768
    %v770 = vsel %vm722, %v769, 0.0
    %771 = vadd.xlane.f32.xlu0 %v770
    %v772 = vpop.xlane.xlu0 %771
    %v773 = vrsqrt.pop %v772
    %v774 = vmul.f32 %v773, %v772
    %v775 = vmul.f32 %v774, %v773
    %v776 = vmul.f32 0.5, %v775
    %v777 = vsub.f32 1.5, %v776
    %v778 = vmul.f32 %v773, %v777
    %v779 = vmul.f32 %v772, %v778
    %vm780 = vcmp.eq.f32.partialorder %v772, inf
    %v781 = vsel %vm780, %v772, %v779
    %vm782 = vcmp.eq.f32.partialorder %v772, 0.0
    %v783 = vand.u32 %v772, 2147483648
    %v784 = vsel %vm782, %v783, %v781
    %v785 = vstv %s49
    %v786 = vmul.f32 %v785, %v784
    %v787 = vmax.f32 %v786, 0.0
    %v788 = vmin.f32 %v787, 0.99999
    %v789 = vadd.f32 %v788, 1.0
    %v790 = vlog2.pop %v789
    %v791 = vmul.f32 %v790, 0.6931472
    %v792 = vmul.f32 -0.5, %v788
    %v793 = vadd.f32 %v792, 1.0
    %v794 = vmul.f32 %v793, %v788
    %v795 = vand.u32 2147483647, %v788
    %vm796 = vcmp.lt.f32.partialorder %v795, 0.0004427343
    %v797 = vsel %vm796, %v794, %v791
    %v798 = vsub.f32 0.0, %v788
    %v799 = vadd.f32 %v798, 1.0
    %v800 = vlog2.pop %v799
    %v801 = vmul.f32 %v800, 0.6931472
    %v802 = vmul.f32 -0.5, %v798
    %v803 = vadd.f32 %v802, 1.0
    %v804 = vmul.f32 %v803, %v798
    %v805 = vand.u32 2147483647, %v798
    %vm806 = vcmp.lt.f32.partialorder %v805, 0.0004427343
    %v807 = vsel %vm806, %v804, %v801
    %v808 = vsub.f32 %v797, %v807
    %v809 = vmul.f32 %v808, 0.5
    %v810 = vmax.f32 %v786, 1e-15
    %v811 = vrcp.pop %v810
    %v812 = vmul.f32 %v809, %v811
    %vm813 = vcmp.lt.f32.partialorder %v786, 0.0001
    %v814 = vsel %vm813, 1.0, %v812
    %v815 = vmul.f32 %v768, %v814
    %v816 = vpack.c.bf16 %v815, %v815
    %v833 = vunpack.c.l.b16 %v178
    %v834 = vunpack.c.l.b16 %v179
    %v835 = vunpack.c.l.b16 %v180
    %v836 = vunpack.c.l.b16 %v181
    %v837 = vunpack.c.l.b16 %v182
    %v838 = vunpack.c.l.b16 %v183
    %v839 = vunpack.c.l.b16 %v184
    %v840 = vunpack.c.l.b16 %v185
    %v841 = vunpack.c.l.b16 %v186
    %v842 = vunpack.c.l.b16 %v187
    %v843 = vunpack.c.l.b16 %v188
    %v844 = vunpack.c.l.b16 %v189
    %v845 = vunpack.c.l.b16 %v190
    %v846 = vunpack.c.l.b16 %v191
    %v847 = vunpack.c.l.b16 %v192
    %v848 = vunpack.c.l.b16 %v193
    %v849 = vpack.c.b16 %v834, %v833
    %v850 = vpack.c.b16 %v836, %v835
    %v851 = vpack.c.b16 %v838, %v837
    %v852 = vpack.c.b16 %v840, %v839
    %v853 = vpack.c.b16 %v842, %v841
    %v854 = vpack.c.b16 %v844, %v843
    %v855 = vpack.c.b16 %v846, %v845
    %v856 = vpack.c.b16 %v848, %v847
    %865 = vmatpush.bf16.msra.mxu0 %v856
    %866 = vmatpush.bf16.msra.mxu0 %v855
    %867 = vmatpush.bf16.msra.mxu0 %v854
    %868 = vmatpush.bf16.msra.mxu0 %v853
    %869 = vmatpush.bf16.msra.mxu0 %v852
    %870 = vmatpush.bf16.msra.mxu0 %v851
    %871 = vmatpush.bf16.msra.mxu0 %v850
    %872 = vmatpush.bf16.msra.mxu0 %v849
    %873 = vmatmul.bf16.gmra.mxu0 %v816
    %v874 = vpop.f32.mrf.mxu0
    %v875 = vadd.f32 0.0, %v874
    %v876 = vpop.f32.mrf.mxu0
    %877 = vdwg.mxu0
    %v878 = vmul.f32 %v875, %v875
    %v879 = vsel %vm722, %v878, 0.0
    %880 = vadd.xlane.f32.xlu0 %v879
    %v881 = vpop.xlane.xlu0 %880
    %v882 = vrsqrt.pop %v881
    %v883 = vmul.f32 %v882, %v881
    %v884 = vmul.f32 %v883, %v882
    %v885 = vmul.f32 0.5, %v884
    %v886 = vsub.f32 1.5, %v885
    %v887 = vmul.f32 %v882, %v886
    %v888 = vmul.f32 %v881, %v887
    %vm889 = vcmp.eq.f32.partialorder %v881, inf
    %v890 = vsel %vm889, %v881, %v888
    %vm891 = vcmp.eq.f32.partialorder %v881, 0.0
    %v892 = vand.u32 %v881, 2147483648
    %v893 = vsel %vm891, %v892, %v890
    %v894 = vmul.f32 %v785, %v893
    %v895 = vtanh.pop %v894
    %v896 = vmax.f32 %v894, 1e-15
    %v897 = vrcp.pop %v896
    %v898 = vmul.f32 %v895, %v897
    %vm899 = vcmp.lt.f32.partialorder %v894, 0.0001
    %v900 = vsel %vm899, 1.0, %v898
    %v901 = vmul.f32 %v875, %v900
    %v902 = vstv %s47
    %v903 = vmul.f32 %v902, %v901
    %v904 = vstv %s48
    %v905 = vmul.f32 %v904, %v768
    %v906 = vadd.f32 %v903, %v905
    %v907 = vsel %vm722, %v906, 0.0
    %v908 = vrot.slane %v907, 4
    %v909 = vadd.f32 %v907, %v908
    %v910 = vrot.slane %v909, 2
    %v911 = vadd.f32 %v909, %v910
    %v912 = vrot.slane %v911, 1
    %v913 = vadd.f32 %v911, %v912
    %v914 = vmul.f32 %v913, %v736
    %v915 = vmul.f32 %v906, %v906
    %v916 = vsel %vm722, %v915, 0.0
    %v917 = vrot.slane %v916, 4
    %v918 = vadd.f32 %v916, %v917
    %v919 = vrot.slane %v918, 2
    %v920 = vadd.f32 %v918, %v919
    %v921 = vrot.slane %v920, 1
    %v922 = vadd.f32 %v920, %v921
    %v923 = vmul.f32 %v922, %v736
    %v924 = vmul.f32 %v914, %v914
    %v925 = vsub.f32 %v923, %v924
    %v926 = vmax.f32 %v925, 0.0
    %v927 = vadd.f32 %v926, 1e-05
    %v928 = vrsqrt.pop %v927
    %v929 = vmul.f32 %v928, %v927
    %v930 = vmul.f32 %v929, %v928
    %v931 = vmul.f32 0.5, %v930
    %v932 = vsub.f32 1.5, %v931
    %v933 = vmul.f32 %v928, %v932
    %vm934 = vweird.f32 %v927
    %vm935 = vweird.f32 %v928
    %vm936 = vmor %vm934, %vm935
    %v937 = vsel %vm936, %v928, %v933
    %v938 = vmul.f32 %v212, %v937
    %v939 = vmul.f32 %v914, %v938
    %v940 = vsub.f32 %v213, %v939
    %v941 = vperm.slane %v938, 0
    %v942 = vmul.f32 %v906, %v941
    %v943 = vperm.slane %v940, 0
    %v944 = vadd.f32 %v942, %v943
    %v945 = vmax.f32 %v944, 0.0
    %v946 = vpack.c.bf16 %v945, %v945
    %v947 = vperm.slane %v214, 0
    %v964 = vunpack.c.l.b16 %v194
    %v965 = vunpack.c.l.b16 %v195
    %v966 = vunpack.c.l.b16 %v196
    %v967 = vunpack.c.l.b16 %v197
    %v968 = vunpack.c.l.b16 %v198
    %v969 = vunpack.c.l.b16 %v199
    %v970 = vunpack.c.l.b16 %v200
    %v971 = vunpack.c.l.b16 %v201
    %v972 = vunpack.c.l.b16 %v202
    %v973 = vunpack.c.l.b16 %v203
    %v974 = vunpack.c.l.b16 %v204
    %v975 = vunpack.c.l.b16 %v205
    %v976 = vunpack.c.l.b16 %v206
    %v977 = vunpack.c.l.b16 %v207
    %v978 = vunpack.c.l.b16 %v208
    %v979 = vunpack.c.l.b16 %v209
    %v980 = vpack.c.b16 %v965, %v964
    %v981 = vpack.c.b16 %v967, %v966
    %v982 = vpack.c.b16 %v969, %v968
    %v983 = vpack.c.b16 %v971, %v970
    %v984 = vpack.c.b16 %v973, %v972
    %v985 = vpack.c.b16 %v975, %v974
    %v986 = vpack.c.b16 %v977, %v976
    %v987 = vpack.c.b16 %v979, %v978
    %996 = vmatpush.bf16.msra.mxu0 %v987
    %997 = vmatpush.bf16.msra.mxu0 %v986
    %998 = vmatpush.bf16.msra.mxu0 %v985
    %999 = vmatpush.bf16.msra.mxu0 %v984
    %1000 = vmatpush.bf16.msra.mxu0 %v983
    %1001 = vmatpush.bf16.msra.mxu0 %v982
    %1002 = vmatpush.bf16.msra.mxu0 %v981
    %1003 = vmatpush.bf16.msra.mxu0 %v980
    %1004 = vmatmul.bf16.gmra.mxu0 %v946
    %v1005 = vpop.f32.mrf.mxu0
    %v1006 = vadd.f32 %v947, %v1005
    %v1007 = vpop.f32.mrf.mxu0
    %1008 = vdwg.mxu0
    %1009 = vst [vmem:[#allocation7] sm:$0x3] %v1006
    // Predicated region
    $region26: #{fft_stacked_hb_fourier.1} parent=1 // pred_check
      _
    $region27: #{fft_stacked_hb_fourier.1} parent=1 // pred_check_branch
      %1011 = sbr.rel (0) target = $region29
    $region28: #{fft_stacked_hb_fourier.1} parent=1 // pred_region
      %1013 = vsyncadd [#allocation4], 0
      %s1015 = sshll.u32 [#allocation7], 4
      %s1016 = int_to_ptr.vmem [resolvable:$true] %s1015
      %s1017 = sshll.u32 %s4, 4
      %s1018 = int_to_ptr.hbm [resolvable:$true] %s1017
      %1020 = dma.vmem_to_hbm [thread:$0]  %s1016, 32, %s1018, [#allocation4]
    $region29: #{fft_stacked_hb_fourier.1} parent=1 // pred_fallthru
      _
    // Predicated region
    $region30: #{fft_stacked_hb_fourier.1} parent=1 // pred_check
      _
    $region31: #{fft_stacked_hb_fourier.1} parent=1 // pred_check_branch
      %1022 = sbr.rel (0) target = $region33
    $region32: #{fft_stacked_hb_fourier.1} parent=1 // pred_region
      %1024 = dma.done [#allocation4], 32
    $region33: #{fft_stacked_hb_fourier.1} parent=1 // pred_fallthru
      _
    %1025 = vsyncpa [#allocation3], 1
    %1026 = vsyncpa [#allocation4], 1
    %1027 = vsyncpa [#allocation5], 1

</llo_original>
